<compile_context>
chip_gen: v7x
topology: tpu7x:2x2x1
jax: 0.10.0
libtpu: 0.0.40
codegen_flags: <defaults>
</compile_context>

<pallas_src>
import functools
import math

import jax
import jax.numpy as jnp
from jax.experimental import pallas as pl
from jax.experimental.pallas import tpu as pltpu


def _round_up(a, m):
    return -(-a // m) * m


def planar_flow_kernel(scal_ref, x_ref, wblk_ref, ublk_ref, out_ref, ldj_ref, *, K):
    b = scal_ref[0]                      # bias (scalar, SMEM)
    uw = scal_ref[1]                     # u . w, precomputed once (scalar, SMEM)

    # lin[r, q] = <segment q of folded row r, w> + b  -- block-diagonal W on the MXU.
    lin = jnp.dot(
        x_ref[...].astype(jnp.float32), wblk_ref[...],
        preferred_element_type=jnp.float32,
        precision=jax.lax.Precision.HIGHEST,
    ) + b                                                        # (TR, K)
    t = jnp.tanh(lin)                                            # EUP, narrow

    # log|det J| = log|1 + (u . w) * (1 - tanh(lin)^2)|
    ldj_ref[...] = jnp.log(jnp.abs(1.0 + uw * (1.0 - t * t))).astype(ldj_ref.dtype)

    # out = u * tanh(lin) + x : broadcast each segment's tanh back over its d lanes.
    tr = lin.shape[0]
    D = out_ref.shape[-1]
    if K == 1:
        y = jnp.broadcast_to(t, (tr, D)) * ublk_ref[...]         # (TR,D) * (1,D)
    else:
        y = jnp.dot(t, ublk_ref[...],
                    preferred_element_type=jnp.float32,
                    precision=jax.lax.Precision.HIGHEST)         # block-diagonal U on MXU
    # Re-read x_ref here instead of keeping the tile live across the whole body.
    out_ref[...] = (y + x_ref[...].astype(jnp.float32)).astype(out_ref.dtype)


def planar_flow(x, u, w, b, *, target_tile_bytes=4 << 20, max_tile_rows=None,
                vmem_limit_bytes=48 << 20):
    """x: (N, d), u: (1, d), w: (d, 1), b: (1,) -> (out (N, d), log_det_jacobian (N, 1))."""
    N, d = x.shape
    out_dtype = x.dtype

    # Smallest fold factor K such that K*d is a multiple of 128 (K == 1 if d already is).
    K = 128 // math.gcd(d, 128)
    D = K * d

    # Pad only when the fold requires it (N % K != 0); otherwise zero extra HBM copies.
    rem = N % K
    if rem:
        x = jnp.pad(x, ((0, K - rem), (0, 0)))
    r = x.shape[0] // K
    x_f = x.reshape(r, D)                                  # free row-major reshape (fold)

    w_col = w.reshape(d, 1).astype(jnp.float32)
    u_row = u.reshape(1, d).astype(jnp.float32)
    eye = jnp.eye(K, dtype=jnp.float32)
    w_blk = jnp.kron(eye, w_col)                           # (D, K) block-diagonal W
    u_blk = jnp.kron(eye, u_row)                           # (K, D) block-diagonal U
    uw = jnp.sum(u_row * w_col.reshape(1, d))              # u . w computed once
    scal = jnp.stack([b.reshape(()).astype(jnp.float32), uw])   # (2,) -> SMEM

    # Tile sizing: ~target_tile_bytes of x per tile, >= ~4 grid steps for v7x megacore,
    # never larger than the (rounded-up) folded-row extent.
    row_bytes = D * x_f.dtype.itemsize
    tile_r = max(8, (target_tile_bytes // row_bytes) // 8 * 8)
    tile_r = min(tile_r, max(8, _round_up(-(-r // 4), 8)))
    if max_tile_rows is not None:
        tile_r = min(tile_r, max(8, (max_tile_rows // 8) * 8))
    tile_r = min(tile_r, _round_up(r, 8))
    grid = (pl.cdiv(r, tile_r),)

    itemsize = jnp.dtype(out_dtype).itemsize
    cost = pl.CostEstimate(
        flops=6 * N * d,
        transcendentals=2 * N,
        bytes_accessed=2 * N * d * itemsize + 4 * N + 4 * D * (K + 1),
    )

    kernel = functools.partial(planar_flow_kernel, K=K)
    out_f, ldj_f = pl.pallas_call(
        kernel,
        grid=grid,
        in_specs=[
            pl.BlockSpec(memory_space=pltpu.MemorySpace.SMEM),   # [b, u.w] scalars
            pl.BlockSpec((tile_r, D), lambda i: (i, 0)),         # x (folded, lane-dense)
            pl.BlockSpec((D, K), lambda i: (0, 0)),              # block-diag W (resident)
            pl.BlockSpec((K, D), lambda i: (0, 0)),              # block-diag U (resident)
        ],
        out_specs=[
            pl.BlockSpec((tile_r, D), lambda i: (i, 0)),         # out (folded, lane-dense)
            pl.BlockSpec((tile_r, K), lambda i: (i, 0)),         # log-det-jacobian (folded)
        ],
        out_shape=(
            jax.ShapeDtypeStruct((r, D), out_dtype),
            jax.ShapeDtypeStruct((r, K), jnp.float32),
        ),
        compiler_params=pltpu.CompilerParams(
            dimension_semantics=("parallel",),     # shard row axis across TCs (v7x megacore)
            vmem_limit_bytes=vmem_limit_bytes,     # fits v7x 64 MiB physical with headroom
        ),
        cost_estimate=cost,
    )(scal, x_f, w_blk, u_blk)

    out = out_f.reshape(r * K, d)                  # free row-major unfold
    ldj = ldj_f.reshape(r * K, 1)
    if rem:                                        # slice only when we actually padded
        out = out[:N]
        ldj = ldj[:N]
    # TODO(synk): like the PyTorch module, there is no u-hat invertibility correction;
    # log|1 + u.w * (1 - tanh^2)| can be -inf exactly at a zero crossing (same as reference).
    return out, ldj


def _reference(x, u, w, b):
    lin = x @ w + b
    out = u * jnp.tanh(lin) + x
    arg = 1.0 + (u @ w) * (1.0 - jnp.tanh(lin) ** 2)
    return out, jnp.abs(arg)


if __name__ == "__main__":
    key = jax.random.PRNGKey(0)

    # SingleFlow(d=32), small batch.
    d = 32
    N = 8
    k_u, k_w, k_x = jax.random.split(key, 3)
    u = jax.random.normal(k_u, (1, d), dtype=jnp.float32)   # nn.Parameter(torch.randn(1, d))
    w = jax.random.normal(k_w, (d, 1), dtype=jnp.float32)   # nn.Parameter(torch.randn(d, 1))
    b = jnp.zeros((1,), dtype=jnp.float32)                  # nn.Parameter(torch.zeros(1))
    x = jax.random.normal(k_x, (N, d), dtype=jnp.float32)

    out, ldj = planar_flow(x, u, w, b)
    jax.block_until_ready(out)
    jax.block_until_ready(ldj)
    out_e, arg_e = _reference(x, u, w, b)
    assert out.shape == (N, d) and ldj.shape == (N, 1)
    assert jnp.allclose(out, out_e, atol=1e-5, rtol=1e-5), "out mismatch"
    assert jnp.allclose(jnp.exp(ldj), arg_e, atol=1e-5, rtol=1e-5), "ldj mismatch"

    # Multi-tile / ragged-grid check (tiny tiles force grid > 1; no wrapper padding).
    N2 = 300
    x2 = jax.random.normal(jax.random.PRNGKey(1), (N2, d), dtype=jnp.float32)
    out2, ldj2 = planar_flow(x2, u, w, b, max_tile_rows=8)
    jax.block_until_ready(out2)
    jax.block_until_ready(ldj2)
    out2_e, arg2_e = _reference(x2, u, w, b)
    assert jnp.allclose(out2, out2_e, atol=1e-5, rtol=1e-5), "out mismatch (multi-tile)"
    assert jnp.allclose(jnp.exp(ldj2), arg2_e, atol=1e-5, rtol=1e-5), "ldj mismatch (multi-tile)"

    # d already a multiple of 128 (K == 1 path), ragged last block.
    d3, N3 = 128, 100
    k_u3, k_w3, k_x3 = jax.random.split(jax.random.PRNGKey(2), 3)
    u3 = jax.random.normal(k_u3, (1, d3), dtype=jnp.float32)
    w3 = jax.random.normal(k_w3, (d3, 1), dtype=jnp.float32)
    x3 = jax.random.normal(k_x3, (N3, d3), dtype=jnp.float32)
    out3, ldj3 = planar_flow(x3, u3, w3, b)
    jax.block_until_ready(out3)
    jax.block_until_ready(ldj3)
    out3_e, arg3_e = _reference(x3, u3, w3, b)
    assert jnp.allclose(out3, out3_e, atol=1e-5, rtol=1e-5), "out mismatch (K=1)"
    assert jnp.allclose(jnp.exp(ldj3), arg3_e, atol=1e-5, rtol=1e-5), "ldj mismatch (K=1)"

    print("KERNEL_OK")
</pallas_src>

<mosaic_0001>
module attributes {stable_mosaic.version = 11 : i64} {
  func.func @planar_flow_kernel(%arg0: i32, %arg1: memref<2xf32, #tpu.memory_space<smem>>, %arg2: memref<8x128xf32, #tpu.memory_space<vmem>>, %arg3: memref<128x4xf32, #tpu.memory_space<vmem>>, %arg4: memref<4x128xf32, #tpu.memory_space<vmem>>, %arg5: memref<8x128xf32, #tpu.memory_space<vmem>>, %arg6: memref<8x4xf32, #tpu.memory_space<vmem>>) attributes {dimension_semantics = [#tpu.dimension_semantics<parallel>], iteration_bounds = array<i64: 1>, scalar_prefetch = 0 : i64, scratch_operands = 0 : i64, tpu.core_type = #tpu.core_type<tc>, window_params = [{transform_indices = @transform_0, window_bounds = array<i64: 2>}, {transform_indices = @transform_1, window_bounds = array<i64: 8, 128>}, {pipeline_mode = #tpu.pipeline_mode<synchronous>, transform_indices = @transform_2, window_bounds = array<i64: 128, 4>}, {pipeline_mode = #tpu.pipeline_mode<synchronous>, transform_indices = @transform_3, window_bounds = array<i64: 4, 128>}, {transform_indices = @transform_4, window_bounds = array<i64: 8, 128>}, {transform_indices = @transform_5, window_bounds = array<i64: 8, 4>}]} {
    %c0 = arith.constant 0 : index
    %0 = memref.load %arg1[%c0] : memref<2xf32, #tpu.memory_space<smem>>
    %c1 = arith.constant 1 : index
    %1 = memref.load %arg1[%c1] : memref<2xf32, #tpu.memory_space<smem>>
    %c0_0 = arith.constant 0 : index
    %c0_1 = arith.constant 0 : index
    %2 = vector.load %arg2[%c0_0, %c0_1] : memref<8x128xf32, #tpu.memory_space<vmem>>, vector<8x128xf32>
    %c0_2 = arith.constant 0 : index
    %c0_3 = arith.constant 0 : index
    %3 = vector.load %arg3[%c0_2, %c0_3] : memref<128x4xf32, #tpu.memory_space<vmem>>, vector<128x4xf32>
    %cst = arith.constant dense<0.000000e+00> : vector<8x4xf32>
    %4 = tpu.matmul %2, %3, %cst {dimension_numbers = #tpu.dot_dimension_numbers<[1], [0], [0], [1], [0, 0, 1, 1], [], []>, precision = #tpu.contract_precision<fp32>} : vector<8x128xf32>, vector<128x4xf32>, vector<8x4xf32> -> vector<8x4xf32>
    %5 = vector.broadcast %0 : f32 to vector<8x4xf32>
    %6 = arith.addf %4, %5 : vector<8x4xf32>
    %7 = math.tanh %6 : vector<8x4xf32>
    %8 = arith.mulf %7, %7 : vector<8x4xf32>
    %cst_4 = arith.constant 1.000000e+00 : f32
    %9 = vector.broadcast %cst_4 : f32 to vector<8x4xf32>
    %10 = arith.subf %9, %8 : vector<8x4xf32>
    %11 = vector.broadcast %1 : f32 to vector<8x4xf32>
    %12 = arith.mulf %11, %10 : vector<8x4xf32>
    %cst_5 = arith.constant 1.000000e+00 : f32
    %13 = vector.broadcast %cst_5 : f32 to vector<8x4xf32>
    %14 = arith.addf %13, %12 : vector<8x4xf32>
    %15 = math.absf %14 : vector<8x4xf32>
    %16 = math.log %15 : vector<8x4xf32>
    %c0_6 = arith.constant 0 : index
    %c0_7 = arith.constant 0 : index
    %17 = vector.load %arg6[%c0_6, %c0_7] : memref<8x4xf32, #tpu.memory_space<vmem>>, vector<8x4xf32>
    tpu.vector_store %arg6[%c0_6, %c0_7], %16 {strides = array<i32>} : memref<8x4xf32, #tpu.memory_space<vmem>>, vector<8x4xf32>,
    %c0_8 = arith.constant 0 : index
    %c0_9 = arith.constant 0 : index
    %18 = vector.load %arg4[%c0_8, %c0_9] : memref<4x128xf32, #tpu.memory_space<vmem>>, vector<4x128xf32>
    %cst_10 = arith.constant dense<0.000000e+00> : vector<8x128xf32>
    %19 = tpu.matmul %7, %18, %cst_10 {dimension_numbers = #tpu.dot_dimension_numbers<[1], [0], [0], [1], [0, 0, 1, 1], [], []>, precision = #tpu.contract_precision<fp32>} : vector<8x4xf32>, vector<4x128xf32>, vector<8x128xf32> -> vector<8x128xf32>
    %c0_11 = arith.constant 0 : index
    %c0_12 = arith.constant 0 : index
    %20 = vector.load %arg2[%c0_11, %c0_12] : memref<8x128xf32, #tpu.memory_space<vmem>>, vector<8x128xf32>
    %21 = arith.addf %19, %20 : vector<8x128xf32>
    %c0_13 = arith.constant 0 : index
    %c0_14 = arith.constant 0 : index
    %22 = vector.load %arg5[%c0_13, %c0_14] : memref<8x128xf32, #tpu.memory_space<vmem>>, vector<8x128xf32>
    tpu.vector_store %arg5[%c0_13, %c0_14], %21 {strides = array<i32>} : memref<8x128xf32, #tpu.memory_space<vmem>>, vector<8x128xf32>,
    return
  }
  func.func @transform_0(%arg0: i32) -> i32 {
    %c0_i32 = arith.constant 0 : i32
    %c0_i32_0 = arith.constant 0 : i32
    return %c0_i32 : i32
  }
  func.func @transform_1(%arg0: i32) -> (i32, i32) {
    %c0_i32 = arith.constant 0 : i32
    %c0_i32_0 = arith.constant 0 : i32
    return %arg0, %c0_i32 : i32, i32
  }
  func.func @transform_2(%arg0: i32) -> (i32, i32) {
    %c0_i32 = arith.constant 0 : i32
    %c0_i32_0 = arith.constant 0 : i32
    %c0_i32_1 = arith.constant 0 : i32
    return %c0_i32, %c0_i32_0 : i32, i32
  }
  func.func @transform_3(%arg0: i32) -> (i32, i32) {
    %c0_i32 = arith.constant 0 : i32
    %c0_i32_0 = arith.constant 0 : i32
    %c0_i32_1 = arith.constant 0 : i32
    return %c0_i32, %c0_i32_0 : i32, i32
  }
  func.func @transform_4(%arg0: i32) -> (i32, i32) {
    %c0_i32 = arith.constant 0 : i32
    %c0_i32_0 = arith.constant 0 : i32
    return %arg0, %c0_i32 : i32, i32
  }
  func.func @transform_5(%arg0: i32) -> (i32, i32) {
    %c0_i32 = arith.constant 0 : i32
    %c0_i32_0 = arith.constant 0 : i32
    return %arg0, %c0_i32 : i32, i32
  }
}

</mosaic_0001>

<llo_original>
// kernel: tpu_custom_call.1
$region0: #{tpu_custom_call.1}
  #allocation0 [shape = 'u32[]', space=smem, size = 0x4, offset = 0x4, fixed_abs, tag = 'smem constant byte address 0x4 - core index']
  #allocation1 [shape = 'u32[144,128]{1,0:T(1,128)}', space=vmem, size = 0x12000, scoped, tag = 'internal scratch']
  %s0 = inlined_call_operand.vmem [shape: f32[2], index: 0, kind: input, shape index: {}]
  %s1 = inlined_call_operand.vmem [shape: f32[2,128], index: 1, kind: input, shape index: {}]
  %s2 = inlined_call_operand.vmem [shape: f32[128,4], index: 2, kind: input, shape index: {}]
  %s3 = inlined_call_operand.vmem [shape: f32[4,128], index: 3, kind: input, shape index: {}]
  %s4 = inlined_call_operand.hbm [shape: f32[2,128], index: 4, kind: output, shape index: {0}]
  %s5 = inlined_call_operand.hbm [shape: f32[2,4], index: 5, kind: output, shape index: {1}]
  %6 = xla_tuple %s4, %s5
  %s7 = sld [smem:[#allocation0]]
  $region38: #{tpu_custom_call.1} parent=0
    _
  %s9 = ssub.s32 1, %s7
  %s10 = scalar_select 0, %s9, %s7
  $region1: #{tpu_custom_call.1} parent=0
    #allocation2 [shape = 'u8[512]{0}', space=smem, size = 0x200, scoped, tag = 'input window, operand 0, single buffered']
    #allocation3 [shape = 's32[1]{0}', space=sflag, size = 0x4, scoped, tag = 'scoped memory for tpu_custom_call.1']
    #allocation4 [shape = 's32[1]{0}', space=sflag, size = 0x4, scoped, tag = 'scoped memory for tpu_custom_call.1']
    #allocation5 [shape = 'u8[4096]{0}', space=vmem, size = 0x1000, scoped, tag = 'output window, operand 0, single buffered']
    #allocation6 [shape = 'u8[4096]{0}', space=vmem, size = 0x1000, scoped, tag = 'output window, operand 1, single buffered']
    #allocation7 [shape = 's32[1]{0}', space=sflag, size = 0x4, scoped, tag = 'scoped memory for tpu_custom_call.1']
    %11 = vsyncpa [#allocation4], 0
    %12 = vsyncpa [#allocation3], 0
    %13 = vsyncpa [#allocation7], 0
    // Predicated region
    $region2: #{tpu_custom_call.1} parent=1 // pred_check
      _
    $region3: #{tpu_custom_call.1} parent=1 // pred_check_branch
      %15 = sbr.rel (0) target = $region5
    $region4: #{tpu_custom_call.1} parent=1 // pred_region
      %s17 = ssub.s32 16, 16
      %18 = vsyncadd [#allocation4], %s17
      %s20 = sshll.u32 %s0, 4
      %s21 = int_to_ptr.vmem [resolvable:$true] %s20
      %23 = dma.vmem_to_smem %s21, 16, [#allocation2], [#allocation4]
    $region5: #{tpu_custom_call.1} parent=1 // pred_fallthru
      _
    // Predicated region
    $region6: #{tpu_custom_call.1} parent=1 // pred_check
      _
    $region7: #{tpu_custom_call.1} parent=1 // pred_check_branch
      %25 = sbr.rel (0) target = $region9
    $region8: #{tpu_custom_call.1} parent=1 // pred_region
      _
    $region9: #{tpu_custom_call.1} parent=1 // pred_fallthru
      _
    // Predicated region
    $region10: #{tpu_custom_call.1} parent=1 // pred_check
      _
    $region11: #{tpu_custom_call.1} parent=1 // pred_check_branch
      %27 = sbr.rel (0) target = $region13
    $region12: #{tpu_custom_call.1} parent=1 // pred_region
      _
    $region13: #{tpu_custom_call.1} parent=1 // pred_fallthru
      _
    // Predicated region
    $region14: #{tpu_custom_call.1} parent=1 // pred_check
      _
    $region15: #{tpu_custom_call.1} parent=1 // pred_check_branch
      %29 = sbr.rel (0) target = $region17
    $region16: #{tpu_custom_call.1} parent=1 // pred_region
      _
    $region17: #{tpu_custom_call.1} parent=1 // pred_fallthru
      _
    // Predicated region
    $region18: #{tpu_custom_call.1} parent=1 // pred_check
      _
    $region19: #{tpu_custom_call.1} parent=1 // pred_check_branch
      %31 = sbr.rel (0) target = $region21
    $region20: #{tpu_custom_call.1} parent=1 // pred_region
      %32 = dma.done [#allocation4], 16
    $region21: #{tpu_custom_call.1} parent=1 // pred_fallthru
      _
    %33 = sfence
    %s34 = sld [smem:[#allocation2]]
    %s35 = sld [smem:[#allocation2 + $0x1]]
    %v36 = vld [vmem:[%s1] sm:$0xff]
    %v37 = vld [vmem:[%s2] sm:$0xff]
    %v38 = vld [vmem:[%s2 + $0x8] sm:$0xff]
    %v39 = vld [vmem:[%s2 + $0x10] sm:$0xff]
    %v40 = vld [vmem:[%s2 + $0x18] sm:$0xff]
    %v41 = vld [vmem:[%s2 + $0x20] sm:$0xff]
    %v42 = vld [vmem:[%s2 + $0x28] sm:$0xff]
    %v43 = vld [vmem:[%s2 + $0x30] sm:$0xff]
    %v44 = vld [vmem:[%s2 + $0x38] sm:$0xff]
    %v45 = vld [vmem:[%s2 + $0x40] sm:$0xff]
    %v46 = vld [vmem:[%s2 + $0x48] sm:$0xff]
    %v47 = vld [vmem:[%s2 + $0x50] sm:$0xff]
    %v48 = vld [vmem:[%s2 + $0x58] sm:$0xff]
    %v49 = vld [vmem:[%s2 + $0x60] sm:$0xff]
    %v50 = vld [vmem:[%s2 + $0x68] sm:$0xff]
    %v51 = vld [vmem:[%s2 + $0x70] sm:$0xff]
    %v52 = vld [vmem:[%s2 + $0x78] sm:$0xff]
    %v53 = vstv %s34
    %54 = vmatprep.subr.mxu0 0.0
    %v55 = vand.u32 %v37, 4294901760
    %56 = vmatpush1.msra.mxu0 %v55
    %57 = vmatprep.subr.mxu0 0.0
    %v58 = vand.u32 %v38, 4294901760
    %59 = vmatpush1.msra.mxu0 %v58
    %60 = vmatprep.subr.mxu0 0.0
    %v61 = vand.u32 %v39, 4294901760
    %62 = vmatpush1.msra.mxu0 %v61
    %63 = vmatprep.subr.mxu0 0.0
    %v64 = vand.u32 %v40, 4294901760
    %65 = vmatpush1.msra.mxu0 %v64
    %66 = vmatprep.subr.mxu0 0.0
    %v67 = vand.u32 %v41, 4294901760
    %68 = vmatpush1.msra.mxu0 %v67
    %69 = vmatprep.subr.mxu0 0.0
    %v70 = vand.u32 %v42, 4294901760
    %71 = vmatpush1.msra.mxu0 %v70
    %72 = vmatprep.subr.mxu0 0.0
    %v73 = vand.u32 %v43, 4294901760
    %74 = vmatpush1.msra.mxu0 %v73
    %75 = vmatprep.subr.mxu0 0.0
    %v76 = vand.u32 %v44, 4294901760
    %77 = vmatpush1.msra.mxu0 %v76
    %78 = vmatprep.subr.mxu0 0.0
    %v79 = vand.u32 %v45, 4294901760
    %80 = vmatpush1.msra.mxu0 %v79
    %81 = vmatprep.subr.mxu0 0.0
    %v82 = vand.u32 %v46, 4294901760
    %83 = vmatpush1.msra.mxu0 %v82
    %84 = vmatprep.subr.mxu0 0.0
    %v85 = vand.u32 %v47, 4294901760
    %86 = vmatpush1.msra.mxu0 %v85
    %87 = vmatprep.subr.mxu0 0.0
    %v88 = vand.u32 %v48, 4294901760
    %89 = vmatpush1.msra.mxu0 %v88
    %90 = vmatprep.subr.mxu0 0.0
    %v91 = vand.u32 %v49, 4294901760
    %92 = vmatpush1.msra.mxu0 %v91
    %93 = vmatprep.subr.mxu0 0.0
    %v94 = vand.u32 %v50, 4294901760
    %95 = vmatpush1.msra.mxu0 %v94
    %96 = vmatprep.subr.mxu0 0.0
    %v97 = vand.u32 %v51, 4294901760
    %98 = vmatpush1.msra.mxu0 %v97
    %99 = vmatprep.subr.mxu0 0.0
    %v100 = vand.u32 %v52, 4294901760
    %101 = vmatpush1.msra.mxu0 %v100
    %102 = vmatprep.subr.mxu0 0.0
    %103 = vmatpush1.msra.mxu0 0.0
    %104 = vmatprep.subr.mxu0 0.0
    %105 = vmatpush1.msra.mxu0 0.0
    %106 = vmatprep.subr.mxu0 0.0
    %107 = vmatpush1.msra.mxu0 0.0
    %108 = vmatprep.subr.mxu0 0.0
    %109 = vmatpush1.msra.mxu0 0.0
    %110 = vmatprep.subr.mxu0 0.0
    %111 = vmatpush1.msra.mxu0 0.0
    %112 = vmatprep.subr.mxu0 0.0
    %113 = vmatpush1.msra.mxu0 0.0
    %114 = vmatprep.subr.mxu0 0.0
    %115 = vmatpush1.msra.mxu0 0.0
    %116 = vmatprep.subr.mxu0 0.0
    %117 = vmatpush1.msra.mxu0 0.0
    %118 = vmatprep.subr.mxu0 0.0
    %119 = vmatpush1.msra.mxu0 0.0
    %120 = vmatprep.subr.mxu0 0.0
    %121 = vmatpush1.msra.mxu0 0.0
    %122 = vmatprep.subr.mxu0 0.0
    %123 = vmatpush1.msra.mxu0 0.0
    %124 = vmatprep.subr.mxu0 0.0
    %125 = vmatpush1.msra.mxu0 0.0
    %126 = vmatprep.subr.mxu0 0.0
    %127 = vmatpush1.msra.mxu0 0.0
    %128 = vmatprep.subr.mxu0 0.0
    %129 = vmatpush1.msra.mxu0 0.0
    %130 = vmatprep.subr.mxu0 0.0
    %131 = vmatpush1.msra.mxu0 0.0
    %132 = vmatprep.subr.mxu0 0.0
    %133 = vmatpush1.msra.mxu0 0.0
    %134 = vmatprep.mubr.f32.mxu0 0.0
    %v135 = vand.u32 %v36, 4294901760
    %v136 = vsub.f32 %v36, %v135
    %v137 = vand.u32 %v136, 4294901760
    %v138 = vsub.f32 %v136, %v137
    %v139 = vand.u32 %v138, 4294901760
    %140 = vmatmul.mubr.f32.gmra.mrb[0].mxu0 %v139
    %v141 = vpop.f32.mrb[0].mxu0
    %v142 = vadd.f32 %v53, %v141
    %v143 = vpop.f32.mrb[0].mxu0
    %144 = vdwg.mxu0
    %145 = vmatprep.subr.mxu0 0.0
    %v146 = vand.u32 %v37, 4294901760
    %v147 = vsub.f32 %v37, %v146
    %v148 = vand.u32 %v147, 4294901760
    %v149 = vsub.f32 %v147, %v148
    %v150 = vand.u32 %v149, 4294901760
    %151 = vmatpush1.msra.mxu0 %v150
    %152 = vmatprep.subr.mxu0 0.0
    %v153 = vand.u32 %v38, 4294901760
    %v154 = vsub.f32 %v38, %v153
    %v155 = vand.u32 %v154, 4294901760
    %v156 = vsub.f32 %v154, %v155
    %v157 = vand.u32 %v156, 4294901760
    %158 = vmatpush1.msra.mxu0 %v157
    %159 = vmatprep.subr.mxu0 0.0
    %v160 = vand.u32 %v39, 4294901760
    %v161 = vsub.f32 %v39, %v160
    %v162 = vand.u32 %v161, 4294901760
    %v163 = vsub.f32 %v161, %v162
    %v164 = vand.u32 %v163, 4294901760
    %165 = vmatpush1.msra.mxu0 %v164
    %166 = vmatprep.subr.mxu0 0.0
    %v167 = vand.u32 %v40, 4294901760
    %v168 = vsub.f32 %v40, %v167
    %v169 = vand.u32 %v168, 4294901760
    %v170 = vsub.f32 %v168, %v169
    %v171 = vand.u32 %v170, 4294901760
    %172 = vmatpush1.msra.mxu0 %v171
    %173 = vmatprep.subr.mxu0 0.0
    %v174 = vand.u32 %v41, 4294901760
    %v175 = vsub.f32 %v41, %v174
    %v176 = vand.u32 %v175, 4294901760
    %v177 = vsub.f32 %v175, %v176
    %v178 = vand.u32 %v177, 4294901760
    %179 = vmatpush1.msra.mxu0 %v178
    %180 = vmatprep.subr.mxu0 0.0
    %v181 = vand.u32 %v42, 4294901760
    %v182 = vsub.f32 %v42, %v181
    %v183 = vand.u32 %v182, 4294901760
    %v184 = vsub.f32 %v182, %v183
    %v185 = vand.u32 %v184, 4294901760
    %186 = vmatpush1.msra.mxu0 %v185
    %187 = vmatprep.subr.mxu0 0.0
    %v188 = vand.u32 %v43, 4294901760
    %v189 = vsub.f32 %v43, %v188
    %v190 = vand.u32 %v189, 4294901760
    %v191 = vsub.f32 %v189, %v190
    %v192 = vand.u32 %v191, 4294901760
    %193 = vmatpush1.msra.mxu0 %v192
    %194 = vmatprep.subr.mxu0 0.0
    %v195 = vand.u32 %v44, 4294901760
    %v196 = vsub.f32 %v44, %v195
    %v197 = vand.u32 %v196, 4294901760
    %v198 = vsub.f32 %v196, %v197
    %v199 = vand.u32 %v198, 4294901760
    %200 = vmatpush1.msra.mxu0 %v199
    %201 = vmatprep.subr.mxu0 0.0
    %v202 = vand.u32 %v45, 4294901760
    %v203 = vsub.f32 %v45, %v202
    %v204 = vand.u32 %v203, 4294901760
    %v205 = vsub.f32 %v203, %v204
    %v206 = vand.u32 %v205, 4294901760
    %207 = vmatpush1.msra.mxu0 %v206
    %208 = vmatprep.subr.mxu0 0.0
    %v209 = vand.u32 %v46, 4294901760
    %v210 = vsub.f32 %v46, %v209
    %v211 = vand.u32 %v210, 4294901760
    %v212 = vsub.f32 %v210, %v211
    %v213 = vand.u32 %v212, 4294901760
    %214 = vmatpush1.msra.mxu0 %v213
    %215 = vmatprep.subr.mxu0 0.0
    %v216 = vand.u32 %v47, 4294901760
    %v217 = vsub.f32 %v47, %v216
    %v218 = vand.u32 %v217, 4294901760
    %v219 = vsub.f32 %v217, %v218
    %v220 = vand.u32 %v219, 4294901760
    %221 = vmatpush1.msra.mxu0 %v220
    %222 = vmatprep.subr.mxu0 0.0
    %v223 = vand.u32 %v48, 4294901760
    %v224 = vsub.f32 %v48, %v223
    %v225 = vand.u32 %v224, 4294901760
    %v226 = vsub.f32 %v224, %v225
    %v227 = vand.u32 %v226, 4294901760
    %228 = vmatpush1.msra.mxu0 %v227
    %229 = vmatprep.subr.mxu0 0.0
    %v230 = vand.u32 %v49, 4294901760
    %v231 = vsub.f32 %v49, %v230
    %v232 = vand.u32 %v231, 4294901760
    %v233 = vsub.f32 %v231, %v232
    %v234 = vand.u32 %v233, 4294901760
    %235 = vmatpush1.msra.mxu0 %v234
    %236 = vmatprep.subr.mxu0 0.0
    %v237 = vand.u32 %v50, 4294901760
    %v238 = vsub.f32 %v50, %v237
    %v239 = vand.u32 %v238, 4294901760
    %v240 = vsub.f32 %v238, %v239
    %v241 = vand.u32 %v240, 4294901760
    %242 = vmatpush1.msra.mxu0 %v241
    %243 = vmatprep.subr.mxu0 0.0
    %v244 = vand.u32 %v51, 4294901760
    %v245 = vsub.f32 %v51, %v244
    %v246 = vand.u32 %v245, 4294901760
    %v247 = vsub.f32 %v245, %v246
    %v248 = vand.u32 %v247, 4294901760
    %249 = vmatpush1.msra.mxu0 %v248
    %250 = vmatprep.subr.mxu0 0.0
    %v251 = vand.u32 %v52, 4294901760
    %v252 = vsub.f32 %v52, %v251
    %v253 = vand.u32 %v252, 4294901760
    %v254 = vsub.f32 %v252, %v253
    %v255 = vand.u32 %v254, 4294901760
    %256 = vmatpush1.msra.mxu0 %v255
    %257 = vmatprep.subr.mxu0 0.0
    %258 = vmatpush1.msra.mxu0 0.0
    %259 = vmatprep.subr.mxu0 0.0
    %260 = vmatpush1.msra.mxu0 0.0
    %261 = vmatprep.subr.mxu0 0.0
    %262 = vmatpush1.msra.mxu0 0.0
    %263 = vmatprep.subr.mxu0 0.0
    %264 = vmatpush1.msra.mxu0 0.0
    %265 = vmatprep.subr.mxu0 0.0
    %266 = vmatpush1.msra.mxu0 0.0
    %267 = vmatprep.subr.mxu0 0.0
    %268 = vmatpush1.msra.mxu0 0.0
    %269 = vmatprep.subr.mxu0 0.0
    %270 = vmatpush1.msra.mxu0 0.0
    %271 = vmatprep.subr.mxu0 0.0
    %272 = vmatpush1.msra.mxu0 0.0
    %273 = vmatprep.subr.mxu0 0.0
    %274 = vmatpush1.msra.mxu0 0.0
    %275 = vmatprep.subr.mxu0 0.0
    %276 = vmatpush1.msra.mxu0 0.0
    %277 = vmatprep.subr.mxu0 0.0
    %278 = vmatpush1.msra.mxu0 0.0
    %279 = vmatprep.subr.mxu0 0.0
    %280 = vmatpush1.msra.mxu0 0.0
    %281 = vmatprep.subr.mxu0 0.0
    %282 = vmatpush1.msra.mxu0 0.0
    %283 = vmatprep.subr.mxu0 0.0
    %284 = vmatpush1.msra.mxu0 0.0
    %285 = vmatprep.subr.mxu0 0.0
    %286 = vmatpush1.msra.mxu0 0.0
    %287 = vmatprep.subr.mxu0 0.0
    %288 = vmatpush1.msra.mxu0 0.0
    %289 = vmatprep.mubr.f32.mxu0 0.0
    %v290 = vand.u32 %v36, 4294901760
    %291 = vmatmul.mubr.f32.gmra.mrb[0].mxu0 %v290
    %v292 = vpop.f32.mrb[0].mxu0
    %v293 = vadd.f32 %v142, %v292
    %v294 = vpop.f32.mrb[0].mxu0
    %295 = vdwg.mxu0
    %296 = vmatprep.subr.mxu0 0.0
    %v297 = vand.u32 %v37, 4294901760
    %v298 = vsub.f32 %v37, %v297
    %299 = vmatpush1.msra.mxu0 %v298
    %300 = vmatprep.subr.mxu0 0.0
    %v301 = vand.u32 %v38, 4294901760
    %v302 = vsub.f32 %v38, %v301
    %303 = vmatpush1.msra.mxu0 %v302
    %304 = vmatprep.subr.mxu0 0.0
    %v305 = vand.u32 %v39, 4294901760
    %v306 = vsub.f32 %v39, %v305
    %307 = vmatpush1.msra.mxu0 %v306
    %308 = vmatprep.subr.mxu0 0.0
    %v309 = vand.u32 %v40, 4294901760
    %v310 = vsub.f32 %v40, %v309
    %311 = vmatpush1.msra.mxu0 %v310
    %312 = vmatprep.subr.mxu0 0.0
    %v313 = vand.u32 %v41, 4294901760
    %v314 = vsub.f32 %v41, %v313
    %315 = vmatpush1.msra.mxu0 %v314
    %316 = vmatprep.subr.mxu0 0.0
    %v317 = vand.u32 %v42, 4294901760
    %v318 = vsub.f32 %v42, %v317
    %319 = vmatpush1.msra.mxu0 %v318
    %320 = vmatprep.subr.mxu0 0.0
    %v321 = vand.u32 %v43, 4294901760
    %v322 = vsub.f32 %v43, %v321
    %323 = vmatpush1.msra.mxu0 %v322
    %324 = vmatprep.subr.mxu0 0.0
    %v325 = vand.u32 %v44, 4294901760
    %v326 = vsub.f32 %v44, %v325
    %327 = vmatpush1.msra.mxu0 %v326
    %328 = vmatprep.subr.mxu0 0.0
    %v329 = vand.u32 %v45, 4294901760
    %v330 = vsub.f32 %v45, %v329
    %331 = vmatpush1.msra.mxu0 %v330
    %332 = vmatprep.subr.mxu0 0.0
    %v333 = vand.u32 %v46, 4294901760
    %v334 = vsub.f32 %v46, %v333
    %335 = vmatpush1.msra.mxu0 %v334
    %336 = vmatprep.subr.mxu0 0.0
    %v337 = vand.u32 %v47, 4294901760
    %v338 = vsub.f32 %v47, %v337
    %339 = vmatpush1.msra.mxu0 %v338
    %340 = vmatprep.subr.mxu0 0.0
    %v341 = vand.u32 %v48, 4294901760
    %v342 = vsub.f32 %v48, %v341
    %343 = vmatpush1.msra.mxu0 %v342
    %344 = vmatprep.subr.mxu0 0.0
    %v345 = vand.u32 %v49, 4294901760
    %v346 = vsub.f32 %v49, %v345
    %347 = vmatpush1.msra.mxu0 %v346
    %348 = vmatprep.subr.mxu0 0.0
    %v349 = vand.u32 %v50, 4294901760
    %v350 = vsub.f32 %v50, %v349
    %351 = vmatpush1.msra.mxu0 %v350
    %352 = vmatprep.subr.mxu0 0.0
    %v353 = vand.u32 %v51, 4294901760
    %v354 = vsub.f32 %v51, %v353
    %355 = vmatpush1.msra.mxu0 %v354
    %356 = vmatprep.subr.mxu0 0.0
    %v357 = vand.u32 %v52, 4294901760
    %v358 = vsub.f32 %v52, %v357
    %359 = vmatpush1.msra.mxu0 %v358
    %360 = vmatprep.subr.mxu0 0.0
    %361 = vmatpush1.msra.mxu0 0.0
    %362 = vmatprep.subr.mxu0 0.0
    %363 = vmatpush1.msra.mxu0 0.0
    %364 = vmatprep.subr.mxu0 0.0
    %365 = vmatpush1.msra.mxu0 0.0
    %366 = vmatprep.subr.mxu0 0.0
    %367 = vmatpush1.msra.mxu0 0.0
    %368 = vmatprep.subr.mxu0 0.0
    %369 = vmatpush1.msra.mxu0 0.0
    %370 = vmatprep.subr.mxu0 0.0
    %371 = vmatpush1.msra.mxu0 0.0
    %372 = vmatprep.subr.mxu0 0.0
    %373 = vmatpush1.msra.mxu0 0.0
    %374 = vmatprep.subr.mxu0 0.0
    %375 = vmatpush1.msra.mxu0 0.0
    %376 = vmatprep.subr.mxu0 0.0
    %377 = vmatpush1.msra.mxu0 0.0
    %378 = vmatprep.subr.mxu0 0.0
    %379 = vmatpush1.msra.mxu0 0.0
    %380 = vmatprep.subr.mxu0 0.0
    %381 = vmatpush1.msra.mxu0 0.0
    %382 = vmatprep.subr.mxu0 0.0
    %383 = vmatpush1.msra.mxu0 0.0
    %384 = vmatprep.subr.mxu0 0.0
    %385 = vmatpush1.msra.mxu0 0.0
    %386 = vmatprep.subr.mxu0 0.0
    %387 = vmatpush1.msra.mxu0 0.0
    %388 = vmatprep.subr.mxu0 0.0
    %389 = vmatpush1.msra.mxu0 0.0
    %390 = vmatprep.subr.mxu0 0.0
    %391 = vmatpush1.msra.mxu0 0.0
    %392 = vmatprep.mubr.f32.mxu0 0.0
    %v393 = vand.u32 %v36, 4294901760
    %v394 = vsub.f32 %v36, %v393
    %395 = vmatmul.mubr.f32.gmra.mrb[0].mxu0 %v394
    %v396 = vpop.f32.mrb[0].mxu0
    %v397 = vadd.f32 %v293, %v396
    %v398 = vpop.f32.mrb[0].mxu0
    %399 = vdwg.mxu0
    %400 = vmatprep.subr.mxu0 0.0
    %v401 = vand.u32 %v37, 4294901760
    %402 = vmatpush1.msra.mxu0 %v401
    %403 = vmatprep.subr.mxu0 0.0
    %v404 = vand.u32 %v38, 4294901760
    %405 = vmatpush1.msra.mxu0 %v404
    %406 = vmatprep.subr.mxu0 0.0
    %v407 = vand.u32 %v39, 4294901760
    %408 = vmatpush1.msra.mxu0 %v407
    %409 = vmatprep.subr.mxu0 0.0
    %v410 = vand.u32 %v40, 4294901760
    %411 = vmatpush1.msra.mxu0 %v410
    %412 = vmatprep.subr.mxu0 0.0
    %v413 = vand.u32 %v41, 4294901760
    %414 = vmatpush1.msra.mxu0 %v413
    %415 = vmatprep.subr.mxu0 0.0
    %v416 = vand.u32 %v42, 4294901760
    %417 = vmatpush1.msra.mxu0 %v416
    %418 = vmatprep.subr.mxu0 0.0
    %v419 = vand.u32 %v43, 4294901760
    %420 = vmatpush1.msra.mxu0 %v419
    %421 = vmatprep.subr.mxu0 0.0
    %v422 = vand.u32 %v44, 4294901760
    %423 = vmatpush1.msra.mxu0 %v422
    %424 = vmatprep.subr.mxu0 0.0
    %v425 = vand.u32 %v45, 4294901760
    %426 = vmatpush1.msra.mxu0 %v425
    %427 = vmatprep.subr.mxu0 0.0
    %v428 = vand.u32 %v46, 4294901760
    %429 = vmatpush1.msra.mxu0 %v428
    %430 = vmatprep.subr.mxu0 0.0
    %v431 = vand.u32 %v47, 4294901760
    %432 = vmatpush1.msra.mxu0 %v431
    %433 = vmatprep.subr.mxu0 0.0
    %v434 = vand.u32 %v48, 4294901760
    %435 = vmatpush1.msra.mxu0 %v434
    %436 = vmatprep.subr.mxu0 0.0
    %v437 = vand.u32 %v49, 4294901760
    %438 = vmatpush1.msra.mxu0 %v437
    %439 = vmatprep.subr.mxu0 0.0
    %v440 = vand.u32 %v50, 4294901760
    %441 = vmatpush1.msra.mxu0 %v440
    %442 = vmatprep.subr.mxu0 0.0
    %v443 = vand.u32 %v51, 4294901760
    %444 = vmatpush1.msra.mxu0 %v443
    %445 = vmatprep.subr.mxu0 0.0
    %v446 = vand.u32 %v52, 4294901760
    %447 = vmatpush1.msra.mxu0 %v446
    %448 = vmatprep.subr.mxu0 0.0
    %449 = vmatpush1.msra.mxu0 0.0
    %450 = vmatprep.subr.mxu0 0.0
    %451 = vmatpush1.msra.mxu0 0.0
    %452 = vmatprep.subr.mxu0 0.0
    %453 = vmatpush1.msra.mxu0 0.0
    %454 = vmatprep.subr.mxu0 0.0
    %455 = vmatpush1.msra.mxu0 0.0
    %456 = vmatprep.subr.mxu0 0.0
    %457 = vmatpush1.msra.mxu0 0.0
    %458 = vmatprep.subr.mxu0 0.0
    %459 = vmatpush1.msra.mxu0 0.0
    %460 = vmatprep.subr.mxu0 0.0
    %461 = vmatpush1.msra.mxu0 0.0
    %462 = vmatprep.subr.mxu0 0.0
    %463 = vmatpush1.msra.mxu0 0.0
    %464 = vmatprep.subr.mxu0 0.0
    %465 = vmatpush1.msra.mxu0 0.0
    %466 = vmatprep.subr.mxu0 0.0
    %467 = vmatpush1.msra.mxu0 0.0
    %468 = vmatprep.subr.mxu0 0.0
    %469 = vmatpush1.msra.mxu0 0.0
    %470 = vmatprep.subr.mxu0 0.0
    %471 = vmatpush1.msra.mxu0 0.0
    %472 = vmatprep.subr.mxu0 0.0
    %473 = vmatpush1.msra.mxu0 0.0
    %474 = vmatprep.subr.mxu0 0.0
    %475 = vmatpush1.msra.mxu0 0.0
    %476 = vmatprep.subr.mxu0 0.0
    %477 = vmatpush1.msra.mxu0 0.0
    %478 = vmatprep.subr.mxu0 0.0
    %479 = vmatpush1.msra.mxu0 0.0
    %480 = vmatprep.mubr.f32.mxu0 0.0
    %v481 = vand.u32 %v36, 4294901760
    %v482 = vsub.f32 %v36, %v481
    %v483 = vand.u32 %v482, 4294901760
    %484 = vmatmul.mubr.f32.gmra.mrb[0].mxu0 %v483
    %v485 = vpop.f32.mrb[0].mxu0
    %v486 = vadd.f32 %v397, %v485
    %v487 = vpop.f32.mrb[0].mxu0
    %488 = vdwg.mxu0
    %489 = vmatprep.subr.mxu0 0.0
    %v490 = vand.u32 %v37, 4294901760
    %v491 = vsub.f32 %v37, %v490
    %v492 = vand.u32 %v491, 4294901760
    %493 = vmatpush1.msra.mxu0 %v492
    %494 = vmatprep.subr.mxu0 0.0
    %v495 = vand.u32 %v38, 4294901760
    %v496 = vsub.f32 %v38, %v495
    %v497 = vand.u32 %v496, 4294901760
    %498 = vmatpush1.msra.mxu0 %v497
    %499 = vmatprep.subr.mxu0 0.0
    %v500 = vand.u32 %v39, 4294901760
    %v501 = vsub.f32 %v39, %v500
    %v502 = vand.u32 %v501, 4294901760
    %503 = vmatpush1.msra.mxu0 %v502
    %504 = vmatprep.subr.mxu0 0.0
    %v505 = vand.u32 %v40, 4294901760
    %v506 = vsub.f32 %v40, %v505
    %v507 = vand.u32 %v506, 4294901760
    %508 = vmatpush1.msra.mxu0 %v507
    %509 = vmatprep.subr.mxu0 0.0
    %v510 = vand.u32 %v41, 4294901760
    %v511 = vsub.f32 %v41, %v510
    %v512 = vand.u32 %v511, 4294901760
    %513 = vmatpush1.msra.mxu0 %v512
    %514 = vmatprep.subr.mxu0 0.0
    %v515 = vand.u32 %v42, 4294901760
    %v516 = vsub.f32 %v42, %v515
    %v517 = vand.u32 %v516, 4294901760
    %518 = vmatpush1.msra.mxu0 %v517
    %519 = vmatprep.subr.mxu0 0.0
    %v520 = vand.u32 %v43, 4294901760
    %v521 = vsub.f32 %v43, %v520
    %v522 = vand.u32 %v521, 4294901760
    %523 = vmatpush1.msra.mxu0 %v522
    %524 = vmatprep.subr.mxu0 0.0
    %v525 = vand.u32 %v44, 4294901760
    %v526 = vsub.f32 %v44, %v525
    %v527 = vand.u32 %v526, 4294901760
    %528 = vmatpush1.msra.mxu0 %v527
    %529 = vmatprep.subr.mxu0 0.0
    %v530 = vand.u32 %v45, 4294901760
    %v531 = vsub.f32 %v45, %v530
    %v532 = vand.u32 %v531, 4294901760
    %533 = vmatpush1.msra.mxu0 %v532
    %534 = vmatprep.subr.mxu0 0.0
    %v535 = vand.u32 %v46, 4294901760
    %v536 = vsub.f32 %v46, %v535
    %v537 = vand.u32 %v536, 4294901760
    %538 = vmatpush1.msra.mxu0 %v537
    %539 = vmatprep.subr.mxu0 0.0
    %v540 = vand.u32 %v47, 4294901760
    %v541 = vsub.f32 %v47, %v540
    %v542 = vand.u32 %v541, 4294901760
    %543 = vmatpush1.msra.mxu0 %v542
    %544 = vmatprep.subr.mxu0 0.0
    %v545 = vand.u32 %v48, 4294901760
    %v546 = vsub.f32 %v48, %v545
    %v547 = vand.u32 %v546, 4294901760
    %548 = vmatpush1.msra.mxu0 %v547
    %549 = vmatprep.subr.mxu0 0.0
    %v550 = vand.u32 %v49, 4294901760
    %v551 = vsub.f32 %v49, %v550
    %v552 = vand.u32 %v551, 4294901760
    %553 = vmatpush1.msra.mxu0 %v552
    %554 = vmatprep.subr.mxu0 0.0
    %v555 = vand.u32 %v50, 4294901760
    %v556 = vsub.f32 %v50, %v555
    %v557 = vand.u32 %v556, 4294901760
    %558 = vmatpush1.msra.mxu0 %v557
    %559 = vmatprep.subr.mxu0 0.0
    %v560 = vand.u32 %v51, 4294901760
    %v561 = vsub.f32 %v51, %v560
    %v562 = vand.u32 %v561, 4294901760
    %563 = vmatpush1.msra.mxu0 %v562
    %564 = vmatprep.subr.mxu0 0.0
    %v565 = vand.u32 %v52, 4294901760
    %v566 = vsub.f32 %v52, %v565
    %v567 = vand.u32 %v566, 4294901760
    %568 = vmatpush1.msra.mxu0 %v567
    %569 = vmatprep.subr.mxu0 0.0
    %570 = vmatpush1.msra.mxu0 0.0
    %571 = vmatprep.subr.mxu0 0.0
    %572 = vmatpush1.msra.mxu0 0.0
    %573 = vmatprep.subr.mxu0 0.0
    %574 = vmatpush1.msra.mxu0 0.0
    %575 = vmatprep.subr.mxu0 0.0
    %576 = vmatpush1.msra.mxu0 0.0
    %577 = vmatprep.subr.mxu0 0.0
    %578 = vmatpush1.msra.mxu0 0.0
    %579 = vmatprep.subr.mxu0 0.0
    %580 = vmatpush1.msra.mxu0 0.0
    %581 = vmatprep.subr.mxu0 0.0
    %582 = vmatpush1.msra.mxu0 0.0
    %583 = vmatprep.subr.mxu0 0.0
    %584 = vmatpush1.msra.mxu0 0.0
    %585 = vmatprep.subr.mxu0 0.0
    %586 = vmatpush1.msra.mxu0 0.0
    %587 = vmatprep.subr.mxu0 0.0
    %588 = vmatpush1.msra.mxu0 0.0
    %589 = vmatprep.subr.mxu0 0.0
    %590 = vmatpush1.msra.mxu0 0.0
    %591 = vmatprep.subr.mxu0 0.0
    %592 = vmatpush1.msra.mxu0 0.0
    %593 = vmatprep.subr.mxu0 0.0
    %594 = vmatpush1.msra.mxu0 0.0
    %595 = vmatprep.subr.mxu0 0.0
    %596 = vmatpush1.msra.mxu0 0.0
    %597 = vmatprep.subr.mxu0 0.0
    %598 = vmatpush1.msra.mxu0 0.0
    %599 = vmatprep.subr.mxu0 0.0
    %600 = vmatpush1.msra.mxu0 0.0
    %601 = vmatprep.mubr.f32.mxu0 0.0
    %v602 = vand.u32 %v36, 4294901760
    %603 = vmatmul.mubr.f32.gmra.mrb[0].mxu0 %v602
    %v604 = vpop.f32.mrb[0].mxu0
    %v605 = vadd.f32 %v486, %v604
    %v606 = vpop.f32.mrb[0].mxu0
    %607 = vdwg.mxu0
    %608 = vmatprep.subr.mxu0 0.0
    %v609 = vand.u32 %v37, 4294901760
    %610 = vmatpush1.msra.mxu0 %v609
    %611 = vmatprep.subr.mxu0 0.0
    %v612 = vand.u32 %v38, 4294901760
    %613 = vmatpush1.msra.mxu0 %v612
    %614 = vmatprep.subr.mxu0 0.0
    %v615 = vand.u32 %v39, 4294901760
    %616 = vmatpush1.msra.mxu0 %v615
    %617 = vmatprep.subr.mxu0 0.0
    %v618 = vand.u32 %v40, 4294901760
    %619 = vmatpush1.msra.mxu0 %v618
    %620 = vmatprep.subr.mxu0 0.0
    %v621 = vand.u32 %v41, 4294901760
    %622 = vmatpush1.msra.mxu0 %v621
    %623 = vmatprep.subr.mxu0 0.0
    %v624 = vand.u32 %v42, 4294901760
    %625 = vmatpush1.msra.mxu0 %v624
    %626 = vmatprep.subr.mxu0 0.0
    %v627 = vand.u32 %v43, 4294901760
    %628 = vmatpush1.msra.mxu0 %v627
    %629 = vmatprep.subr.mxu0 0.0
    %v630 = vand.u32 %v44, 4294901760
    %631 = vmatpush1.msra.mxu0 %v630
    %632 = vmatprep.subr.mxu0 0.0
    %v633 = vand.u32 %v45, 4294901760
    %634 = vmatpush1.msra.mxu0 %v633
    %635 = vmatprep.subr.mxu0 0.0
    %v636 = vand.u32 %v46, 4294901760
    %637 = vmatpush1.msra.mxu0 %v636
    %638 = vmatprep.subr.mxu0 0.0
    %v639 = vand.u32 %v47, 4294901760
    %640 = vmatpush1.msra.mxu0 %v639
    %641 = vmatprep.subr.mxu0 0.0
    %v642 = vand.u32 %v48, 4294901760
    %643 = vmatpush1.msra.mxu0 %v642
    %644 = vmatprep.subr.mxu0 0.0
    %v645 = vand.u32 %v49, 4294901760
    %646 = vmatpush1.msra.mxu0 %v645
    %647 = vmatprep.subr.mxu0 0.0
    %v648 = vand.u32 %v50, 4294901760
    %649 = vmatpush1.msra.mxu0 %v648
    %650 = vmatprep.subr.mxu0 0.0
    %v651 = vand.u32 %v51, 4294901760
    %652 = vmatpush1.msra.mxu0 %v651
    %653 = vmatprep.subr.mxu0 0.0
    %v654 = vand.u32 %v52, 4294901760
    %655 = vmatpush1.msra.mxu0 %v654
    %656 = vmatprep.subr.mxu0 0.0
    %657 = vmatpush1.msra.mxu0 0.0
    %658 = vmatprep.subr.mxu0 0.0
    %659 = vmatpush1.msra.mxu0 0.0
    %660 = vmatprep.subr.mxu0 0.0
    %661 = vmatpush1.msra.mxu0 0.0
    %662 = vmatprep.subr.mxu0 0.0
    %663 = vmatpush1.msra.mxu0 0.0
    %664 = vmatprep.subr.mxu0 0.0
    %665 = vmatpush1.msra.mxu0 0.0
    %666 = vmatprep.subr.mxu0 0.0
    %667 = vmatpush1.msra.mxu0 0.0
    %668 = vmatprep.subr.mxu0 0.0
    %669 = vmatpush1.msra.mxu0 0.0
    %670 = vmatprep.subr.mxu0 0.0
    %671 = vmatpush1.msra.mxu0 0.0
    %672 = vmatprep.subr.mxu0 0.0
    %673 = vmatpush1.msra.mxu0 0.0
    %674 = vmatprep.subr.mxu0 0.0
    %675 = vmatpush1.msra.mxu0 0.0
    %676 = vmatprep.subr.mxu0 0.0
    %677 = vmatpush1.msra.mxu0 0.0
    %678 = vmatprep.subr.mxu0 0.0
    %679 = vmatpush1.msra.mxu0 0.0
    %680 = vmatprep.subr.mxu0 0.0
    %681 = vmatpush1.msra.mxu0 0.0
    %682 = vmatprep.subr.mxu0 0.0
    %683 = vmatpush1.msra.mxu0 0.0
    %684 = vmatprep.subr.mxu0 0.0
    %685 = vmatpush1.msra.mxu0 0.0
    %686 = vmatprep.subr.mxu0 0.0
    %687 = vmatpush1.msra.mxu0 0.0
    %688 = vmatprep.mubr.f32.mxu0 0.0
    %v689 = vand.u32 %v36, 4294901760
    %690 = vmatmul.mubr.f32.gmra.mrb[0].mxu0 %v689
    %v691 = vpop.f32.mrb[0].mxu0
    %v692 = vadd.f32 %v605, %v691
    %v693 = vpop.f32.mrb[0].mxu0
    %694 = vdwg.mxu0
    %v695 = vtanh.pop %v692
    %v696 = vmul.f32 %v695, %v695
    %v697 = vsub.f32 1.0, %v696
    %v698 = vstv %s35
    %v699 = vmul.f32 %v698, %v697
    %v700 = vadd.f32 %v699, 1.0
    %v701 = vand.u32 2147483647, %v700
    %v702 = vlog2.pop %v701
    %v703 = vmul.f32 %v702, 0.6931472
    %vm704 = vcmask 31744
    %705 = vst.msk [vmem:[#allocation6] sm:$0xff] %vm704, %v703
    %v706 = vld [vmem:[%s3] sm:$0xf]
    %v707 = vld [vmem:[%s1] sm:$0xff]
    %v709 = vsel %vm704, %v695, 0
    %vm711 = vcmask 1043456
    %v713 = vsel %vm711, %v706, 0
    %715 = vmatprep.subr.mxu0 0.0
    %v716 = vand.u32 %v713, 4294901760
    %717 = vmatpush1.msra.mxu0 %v716
    %718 = vmatprep.subr.mxu0 0.0
    %719 = vmatpush1.msra.mxu0 0.0
    %720 = vmatprep.subr.mxu0 0.0
    %721 = vmatpush1.msra.mxu0 0.0
    %722 = vmatprep.subr.mxu0 0.0
    %723 = vmatpush1.msra.mxu0 0.0
    %724 = vmatprep.subr.mxu0 0.0
    %725 = vmatpush1.msra.mxu0 0.0
    %726 = vmatprep.subr.mxu0 0.0
    %727 = vmatpush1.msra.mxu0 0.0
    %728 = vmatprep.subr.mxu0 0.0
    %729 = vmatpush1.msra.mxu0 0.0
    %730 = vmatprep.subr.mxu0 0.0
    %731 = vmatpush1.msra.mxu0 0.0
    %732 = vmatprep.subr.mxu0 0.0
    %733 = vmatpush1.msra.mxu0 0.0
    %734 = vmatprep.subr.mxu0 0.0
    %735 = vmatpush1.msra.mxu0 0.0
    %736 = vmatprep.subr.mxu0 0.0
    %737 = vmatpush1.msra.mxu0 0.0
    %738 = vmatprep.subr.mxu0 0.0
    %739 = vmatpush1.msra.mxu0 0.0
    %740 = vmatprep.subr.mxu0 0.0
    %741 = vmatpush1.msra.mxu0 0.0
    %742 = vmatprep.subr.mxu0 0.0
    %743 = vmatpush1.msra.mxu0 0.0
    %744 = vmatprep.subr.mxu0 0.0
    %745 = vmatpush1.msra.mxu0 0.0
    %746 = vmatprep.subr.mxu0 0.0
    %747 = vmatpush1.msra.mxu0 0.0
    %748 = vmatprep.subr.mxu0 0.0
    %749 = vmatpush1.msra.mxu0 0.0
    %750 = vmatprep.subr.mxu0 0.0
    %751 = vmatpush1.msra.mxu0 0.0
    %752 = vmatprep.subr.mxu0 0.0
    %753 = vmatpush1.msra.mxu0 0.0
    %754 = vmatprep.subr.mxu0 0.0
    %755 = vmatpush1.msra.mxu0 0.0
    %756 = vmatprep.subr.mxu0 0.0
    %757 = vmatpush1.msra.mxu0 0.0
    %758 = vmatprep.subr.mxu0 0.0
    %759 = vmatpush1.msra.mxu0 0.0
    %760 = vmatprep.subr.mxu0 0.0
    %761 = vmatpush1.msra.mxu0 0.0
    %762 = vmatprep.subr.mxu0 0.0
    %763 = vmatpush1.msra.mxu0 0.0
    %764 = vmatprep.subr.mxu0 0.0
    %765 = vmatpush1.msra.mxu0 0.0
    %766 = vmatprep.subr.mxu0 0.0
    %767 = vmatpush1.msra.mxu0 0.0
    %768 = vmatprep.subr.mxu0 0.0
    %769 = vmatpush1.msra.mxu0 0.0
    %770 = vmatprep.subr.mxu0 0.0
    %771 = vmatpush1.msra.mxu0 0.0
    %772 = vmatprep.subr.mxu0 0.0
    %773 = vmatpush1.msra.mxu0 0.0
    %774 = vmatprep.subr.mxu0 0.0
    %775 = vmatpush1.msra.mxu0 0.0
    %776 = vmatprep.subr.mxu0 0.0
    %777 = vmatpush1.msra.mxu0 0.0
    %778 = vmatprep.subr.mxu0 0.0
    %779 = vmatpush1.msra.mxu0 0.0
    %780 = vmatprep.mubr.f32.mxu0 0.0
    %v781 = vand.u32 %v709, 4294901760
    %v782 = vsub.f32 %v709, %v781
    %v783 = vand.u32 %v782, 4294901760
    %v784 = vsub.f32 %v782, %v783
    %v785 = vand.u32 %v784, 4294901760
    %786 = vmatmul.mubr.f32.gmra.mrb[0].mxu0 %v785
    %v787 = vpop.f32.mrb[0].mxu0
    %v788 = vadd.f32 %v707, %v787
    %v789 = vpop.f32.mrb[0].mxu0
    %790 = vdwg.mxu0
    %791 = vmatprep.subr.mxu0 0.0
    %v792 = vand.u32 %v713, 4294901760
    %v793 = vsub.f32 %v713, %v792
    %v794 = vand.u32 %v793, 4294901760
    %v795 = vsub.f32 %v793, %v794
    %v796 = vand.u32 %v795, 4294901760
    %797 = vmatpush1.msra.mxu0 %v796
    %798 = vmatprep.subr.mxu0 0.0
    %799 = vmatpush1.msra.mxu0 0.0
    %800 = vmatprep.subr.mxu0 0.0
    %801 = vmatpush1.msra.mxu0 0.0
    %802 = vmatprep.subr.mxu0 0.0
    %803 = vmatpush1.msra.mxu0 0.0
    %804 = vmatprep.subr.mxu0 0.0
    %805 = vmatpush1.msra.mxu0 0.0
    %806 = vmatprep.subr.mxu0 0.0
    %807 = vmatpush1.msra.mxu0 0.0
    %808 = vmatprep.subr.mxu0 0.0
    %809 = vmatpush1.msra.mxu0 0.0
    %810 = vmatprep.subr.mxu0 0.0
    %811 = vmatpush1.msra.mxu0 0.0
    %812 = vmatprep.subr.mxu0 0.0
    %813 = vmatpush1.msra.mxu0 0.0
    %814 = vmatprep.subr.mxu0 0.0
    %815 = vmatpush1.msra.mxu0 0.0
    %816 = vmatprep.subr.mxu0 0.0
    %817 = vmatpush1.msra.mxu0 0.0
    %818 = vmatprep.subr.mxu0 0.0
    %819 = vmatpush1.msra.mxu0 0.0
    %820 = vmatprep.subr.mxu0 0.0
    %821 = vmatpush1.msra.mxu0 0.0
    %822 = vmatprep.subr.mxu0 0.0
    %823 = vmatpush1.msra.mxu0 0.0
    %824 = vmatprep.subr.mxu0 0.0
    %825 = vmatpush1.msra.mxu0 0.0
    %826 = vmatprep.subr.mxu0 0.0
    %827 = vmatpush1.msra.mxu0 0.0
    %828 = vmatprep.subr.mxu0 0.0
    %829 = vmatpush1.msra.mxu0 0.0
    %830 = vmatprep.subr.mxu0 0.0
    %831 = vmatpush1.msra.mxu0 0.0
    %832 = vmatprep.subr.mxu0 0.0
    %833 = vmatpush1.msra.mxu0 0.0
    %834 = vmatprep.subr.mxu0 0.0
    %835 = vmatpush1.msra.mxu0 0.0
    %836 = vmatprep.subr.mxu0 0.0
    %837 = vmatpush1.msra.mxu0 0.0
    %838 = vmatprep.subr.mxu0 0.0
    %839 = vmatpush1.msra.mxu0 0.0
    %840 = vmatprep.subr.mxu0 0.0
    %841 = vmatpush1.msra.mxu0 0.0
    %842 = vmatprep.subr.mxu0 0.0
    %843 = vmatpush1.msra.mxu0 0.0
    %844 = vmatprep.subr.mxu0 0.0
    %845 = vmatpush1.msra.mxu0 0.0
    %846 = vmatprep.subr.mxu0 0.0
    %847 = vmatpush1.msra.mxu0 0.0
    %848 = vmatprep.subr.mxu0 0.0
    %849 = vmatpush1.msra.mxu0 0.0
    %850 = vmatprep.subr.mxu0 0.0
    %851 = vmatpush1.msra.mxu0 0.0
    %852 = vmatprep.subr.mxu0 0.0
    %853 = vmatpush1.msra.mxu0 0.0
    %854 = vmatprep.subr.mxu0 0.0
    %855 = vmatpush1.msra.mxu0 0.0
    %856 = vmatprep.subr.mxu0 0.0
    %857 = vmatpush1.msra.mxu0 0.0
    %858 = vmatprep.subr.mxu0 0.0
    %859 = vmatpush1.msra.mxu0 0.0
    %860 = vmatprep.mubr.f32.mxu0 0.0
    %v861 = vand.u32 %v709, 4294901760
    %862 = vmatmul.mubr.f32.gmra.mrb[0].mxu0 %v861
    %v863 = vpop.f32.mrb[0].mxu0
    %v864 = vadd.f32 %v788, %v863
    %v865 = vpop.f32.mrb[0].mxu0
    %866 = vdwg.mxu0
    %867 = vmatprep.subr.mxu0 0.0
    %v868 = vand.u32 %v713, 4294901760
    %v869 = vsub.f32 %v713, %v868
    %870 = vmatpush1.msra.mxu0 %v869
    %871 = vmatprep.subr.mxu0 0.0
    %872 = vmatpush1.msra.mxu0 0.0
    %873 = vmatprep.subr.mxu0 0.0
    %874 = vmatpush1.msra.mxu0 0.0
    %875 = vmatprep.subr.mxu0 0.0
    %876 = vmatpush1.msra.mxu0 0.0
    %877 = vmatprep.subr.mxu0 0.0
    %878 = vmatpush1.msra.mxu0 0.0
    %879 = vmatprep.subr.mxu0 0.0
    %880 = vmatpush1.msra.mxu0 0.0
    %881 = vmatprep.subr.mxu0 0.0
    %882 = vmatpush1.msra.mxu0 0.0
    %883 = vmatprep.subr.mxu0 0.0
    %884 = vmatpush1.msra.mxu0 0.0
    %885 = vmatprep.subr.mxu0 0.0
    %886 = vmatpush1.msra.mxu0 0.0
    %887 = vmatprep.subr.mxu0 0.0
    %888 = vmatpush1.msra.mxu0 0.0
    %889 = vmatprep.subr.mxu0 0.0
    %890 = vmatpush1.msra.mxu0 0.0
    %891 = vmatprep.subr.mxu0 0.0
    %892 = vmatpush1.msra.mxu0 0.0
    %893 = vmatprep.subr.mxu0 0.0
    %894 = vmatpush1.msra.mxu0 0.0
    %895 = vmatprep.subr.mxu0 0.0
    %896 = vmatpush1.msra.mxu0 0.0
    %897 = vmatprep.subr.mxu0 0.0
    %898 = vmatpush1.msra.mxu0 0.0
    %899 = vmatprep.subr.mxu0 0.0
    %900 = vmatpush1.msra.mxu0 0.0
    %901 = vmatprep.subr.mxu0 0.0
    %902 = vmatpush1.msra.mxu0 0.0
    %903 = vmatprep.subr.mxu0 0.0
    %904 = vmatpush1.msra.mxu0 0.0
    %905 = vmatprep.subr.mxu0 0.0
    %906 = vmatpush1.msra.mxu0 0.0
    %907 = vmatprep.subr.mxu0 0.0
    %908 = vmatpush1.msra.mxu0 0.0
    %909 = vmatprep.subr.mxu0 0.0
    %910 = vmatpush1.msra.mxu0 0.0
    %911 = vmatprep.subr.mxu0 0.0
    %912 = vmatpush1.msra.mxu0 0.0
    %913 = vmatprep.subr.mxu0 0.0
    %914 = vmatpush1.msra.mxu0 0.0
    %915 = vmatprep.subr.mxu0 0.0
    %916 = vmatpush1.msra.mxu0 0.0
    %917 = vmatprep.subr.mxu0 0.0
    %918 = vmatpush1.msra.mxu0 0.0
    %919 = vmatprep.subr.mxu0 0.0
    %920 = vmatpush1.msra.mxu0 0.0
    %921 = vmatprep.subr.mxu0 0.0
    %922 = vmatpush1.msra.mxu0 0.0
    %923 = vmatprep.subr.mxu0 0.0
    %924 = vmatpush1.msra.mxu0 0.0
    %925 = vmatprep.subr.mxu0 0.0
    %926 = vmatpush1.msra.mxu0 0.0
    %927 = vmatprep.subr.mxu0 0.0
    %928 = vmatpush1.msra.mxu0 0.0
    %929 = vmatprep.subr.mxu0 0.0
    %930 = vmatpush1.msra.mxu0 0.0
    %931 = vmatprep.subr.mxu0 0.0
    %932 = vmatpush1.msra.mxu0 0.0
    %933 = vmatprep.mubr.f32.mxu0 0.0
    %v934 = vand.u32 %v709, 4294901760
    %v935 = vsub.f32 %v709, %v934
    %936 = vmatmul.mubr.f32.gmra.mrb[0].mxu0 %v935
    %v937 = vpop.f32.mrb[0].mxu0
    %v938 = vadd.f32 %v864, %v937
    %v939 = vpop.f32.mrb[0].mxu0
    %940 = vdwg.mxu0
    %941 = vmatprep.subr.mxu0 0.0
    %v942 = vand.u32 %v713, 4294901760
    %943 = vmatpush1.msra.mxu0 %v942
    %944 = vmatprep.subr.mxu0 0.0
    %945 = vmatpush1.msra.mxu0 0.0
    %946 = vmatprep.subr.mxu0 0.0
    %947 = vmatpush1.msra.mxu0 0.0
    %948 = vmatprep.subr.mxu0 0.0
    %949 = vmatpush1.msra.mxu0 0.0
    %950 = vmatprep.subr.mxu0 0.0
    %951 = vmatpush1.msra.mxu0 0.0
    %952 = vmatprep.subr.mxu0 0.0
    %953 = vmatpush1.msra.mxu0 0.0
    %954 = vmatprep.subr.mxu0 0.0
    %955 = vmatpush1.msra.mxu0 0.0
    %956 = vmatprep.subr.mxu0 0.0
    %957 = vmatpush1.msra.mxu0 0.0
    %958 = vmatprep.subr.mxu0 0.0
    %959 = vmatpush1.msra.mxu0 0.0
    %960 = vmatprep.subr.mxu0 0.0
    %961 = vmatpush1.msra.mxu0 0.0
    %962 = vmatprep.subr.mxu0 0.0
    %963 = vmatpush1.msra.mxu0 0.0
    %964 = vmatprep.subr.mxu0 0.0
    %965 = vmatpush1.msra.mxu0 0.0
    %966 = vmatprep.subr.mxu0 0.0
    %967 = vmatpush1.msra.mxu0 0.0
    %968 = vmatprep.subr.mxu0 0.0
    %969 = vmatpush1.msra.mxu0 0.0
    %970 = vmatprep.subr.mxu0 0.0
    %971 = vmatpush1.msra.mxu0 0.0
    %972 = vmatprep.subr.mxu0 0.0
    %973 = vmatpush1.msra.mxu0 0.0
    %974 = vmatprep.subr.mxu0 0.0
    %975 = vmatpush1.msra.mxu0 0.0
    %976 = vmatprep.subr.mxu0 0.0
    %977 = vmatpush1.msra.mxu0 0.0
    %978 = vmatprep.subr.mxu0 0.0
    %979 = vmatpush1.msra.mxu0 0.0
    %980 = vmatprep.subr.mxu0 0.0
    %981 = vmatpush1.msra.mxu0 0.0
    %982 = vmatprep.subr.mxu0 0.0
    %983 = vmatpush1.msra.mxu0 0.0
    %984 = vmatprep.subr.mxu0 0.0
    %985 = vmatpush1.msra.mxu0 0.0
    %986 = vmatprep.subr.mxu0 0.0
    %987 = vmatpush1.msra.mxu0 0.0
    %988 = vmatprep.subr.mxu0 0.0
    %989 = vmatpush1.msra.mxu0 0.0
    %990 = vmatprep.subr.mxu0 0.0
    %991 = vmatpush1.msra.mxu0 0.0
    %992 = vmatprep.subr.mxu0 0.0
    %993 = vmatpush1.msra.mxu0 0.0
    %994 = vmatprep.subr.mxu0 0.0
    %995 = vmatpush1.msra.mxu0 0.0
    %996 = vmatprep.subr.mxu0 0.0
    %997 = vmatpush1.msra.mxu0 0.0
    %998 = vmatprep.subr.mxu0 0.0
    %999 = vmatpush1.msra.mxu0 0.0
    %1000 = vmatprep.subr.mxu0 0.0
    %1001 = vmatpush1.msra.mxu0 0.0
    %1002 = vmatprep.subr.mxu0 0.0
    %1003 = vmatpush1.msra.mxu0 0.0
    %1004 = vmatprep.subr.mxu0 0.0
    %1005 = vmatpush1.msra.mxu0 0.0
    %1006 = vmatprep.mubr.f32.mxu0 0.0
    %v1007 = vand.u32 %v709, 4294901760
    %v1008 = vsub.f32 %v709, %v1007
    %v1009 = vand.u32 %v1008, 4294901760
    %1010 = vmatmul.mubr.f32.gmra.mrb[0].mxu0 %v1009
    %v1011 = vpop.f32.mrb[0].mxu0
    %v1012 = vadd.f32 %v938, %v1011
    %v1013 = vpop.f32.mrb[0].mxu0
    %1014 = vdwg.mxu0
    %1015 = vmatprep.subr.mxu0 0.0
    %v1016 = vand.u32 %v713, 4294901760
    %v1017 = vsub.f32 %v713, %v1016
    %v1018 = vand.u32 %v1017, 4294901760
    %1019 = vmatpush1.msra.mxu0 %v1018
    %1020 = vmatprep.subr.mxu0 0.0
    %1021 = vmatpush1.msra.mxu0 0.0
    %1022 = vmatprep.subr.mxu0 0.0
    %1023 = vmatpush1.msra.mxu0 0.0
    %1024 = vmatprep.subr.mxu0 0.0
    %1025 = vmatpush1.msra.mxu0 0.0
    %1026 = vmatprep.subr.mxu0 0.0
    %1027 = vmatpush1.msra.mxu0 0.0
    %1028 = vmatprep.subr.mxu0 0.0
    %1029 = vmatpush1.msra.mxu0 0.0
    %1030 = vmatprep.subr.mxu0 0.0
    %1031 = vmatpush1.msra.mxu0 0.0
    %1032 = vmatprep.subr.mxu0 0.0
    %1033 = vmatpush1.msra.mxu0 0.0
    %1034 = vmatprep.subr.mxu0 0.0
    %1035 = vmatpush1.msra.mxu0 0.0
    %1036 = vmatprep.subr.mxu0 0.0
    %1037 = vmatpush1.msra.mxu0 0.0
    %1038 = vmatprep.subr.mxu0 0.0
    %1039 = vmatpush1.msra.mxu0 0.0
    %1040 = vmatprep.subr.mxu0 0.0
    %1041 = vmatpush1.msra.mxu0 0.0
    %1042 = vmatprep.subr.mxu0 0.0
    %1043 = vmatpush1.msra.mxu0 0.0
    %1044 = vmatprep.subr.mxu0 0.0
    %1045 = vmatpush1.msra.mxu0 0.0
    %1046 = vmatprep.subr.mxu0 0.0
    %1047 = vmatpush1.msra.mxu0 0.0
    %1048 = vmatprep.subr.mxu0 0.0
    %1049 = vmatpush1.msra.mxu0 0.0
    %1050 = vmatprep.subr.mxu0 0.0
    %1051 = vmatpush1.msra.mxu0 0.0
    %1052 = vmatprep.subr.mxu0 0.0
    %1053 = vmatpush1.msra.mxu0 0.0
    %1054 = vmatprep.subr.mxu0 0.0
    %1055 = vmatpush1.msra.mxu0 0.0
    %1056 = vmatprep.subr.mxu0 0.0
    %1057 = vmatpush1.msra.mxu0 0.0
    %1058 = vmatprep.subr.mxu0 0.0
    %1059 = vmatpush1.msra.mxu0 0.0
    %1060 = vmatprep.subr.mxu0 0.0
    %1061 = vmatpush1.msra.mxu0 0.0
    %1062 = vmatprep.subr.mxu0 0.0
    %1063 = vmatpush1.msra.mxu0 0.0
    %1064 = vmatprep.subr.mxu0 0.0
    %1065 = vmatpush1.msra.mxu0 0.0
    %1066 = vmatprep.subr.mxu0 0.0
    %1067 = vmatpush1.msra.mxu0 0.0
    %1068 = vmatprep.subr.mxu0 0.0
    %1069 = vmatpush1.msra.mxu0 0.0
    %1070 = vmatprep.subr.mxu0 0.0
    %1071 = vmatpush1.msra.mxu0 0.0
    %1072 = vmatprep.subr.mxu0 0.0
    %1073 = vmatpush1.msra.mxu0 0.0
    %1074 = vmatprep.subr.mxu0 0.0
    %1075 = vmatpush1.msra.mxu0 0.0
    %1076 = vmatprep.subr.mxu0 0.0
    %1077 = vmatpush1.msra.mxu0 0.0
    %1078 = vmatprep.subr.mxu0 0.0
    %1079 = vmatpush1.msra.mxu0 0.0
    %1080 = vmatprep.subr.mxu0 0.0
    %1081 = vmatpush1.msra.mxu0 0.0
    %1082 = vmatprep.mubr.f32.mxu0 0.0
    %v1083 = vand.u32 %v709, 4294901760
    %1084 = vmatmul.mubr.f32.gmra.mrb[0].mxu0 %v1083
    %v1085 = vpop.f32.mrb[0].mxu0
    %v1086 = vadd.f32 %v1012, %v1085
    %v1087 = vpop.f32.mrb[0].mxu0
    %1088 = vdwg.mxu0
    %1089 = vmatprep.subr.mxu0 0.0
    %v1090 = vand.u32 %v713, 4294901760
    %1091 = vmatpush1.msra.mxu0 %v1090
    %1092 = vmatprep.subr.mxu0 0.0
    %1093 = vmatpush1.msra.mxu0 0.0
    %1094 = vmatprep.subr.mxu0 0.0
    %1095 = vmatpush1.msra.mxu0 0.0
    %1096 = vmatprep.subr.mxu0 0.0
    %1097 = vmatpush1.msra.mxu0 0.0
    %1098 = vmatprep.subr.mxu0 0.0
    %1099 = vmatpush1.msra.mxu0 0.0
    %1100 = vmatprep.subr.mxu0 0.0
    %1101 = vmatpush1.msra.mxu0 0.0
    %1102 = vmatprep.subr.mxu0 0.0
    %1103 = vmatpush1.msra.mxu0 0.0
    %1104 = vmatprep.subr.mxu0 0.0
    %1105 = vmatpush1.msra.mxu0 0.0
    %1106 = vmatprep.subr.mxu0 0.0
    %1107 = vmatpush1.msra.mxu0 0.0
    %1108 = vmatprep.subr.mxu0 0.0
    %1109 = vmatpush1.msra.mxu0 0.0
    %1110 = vmatprep.subr.mxu0 0.0
    %1111 = vmatpush1.msra.mxu0 0.0
    %1112 = vmatprep.subr.mxu0 0.0
    %1113 = vmatpush1.msra.mxu0 0.0
    %1114 = vmatprep.subr.mxu0 0.0
    %1115 = vmatpush1.msra.mxu0 0.0
    %1116 = vmatprep.subr.mxu0 0.0
    %1117 = vmatpush1.msra.mxu0 0.0
    %1118 = vmatprep.subr.mxu0 0.0
    %1119 = vmatpush1.msra.mxu0 0.0
    %1120 = vmatprep.subr.mxu0 0.0
    %1121 = vmatpush1.msra.mxu0 0.0
    %1122 = vmatprep.subr.mxu0 0.0
    %1123 = vmatpush1.msra.mxu0 0.0
    %1124 = vmatprep.subr.mxu0 0.0
    %1125 = vmatpush1.msra.mxu0 0.0
    %1126 = vmatprep.subr.mxu0 0.0
    %1127 = vmatpush1.msra.mxu0 0.0
    %1128 = vmatprep.subr.mxu0 0.0
    %1129 = vmatpush1.msra.mxu0 0.0
    %1130 = vmatprep.subr.mxu0 0.0
    %1131 = vmatpush1.msra.mxu0 0.0
    %1132 = vmatprep.subr.mxu0 0.0
    %1133 = vmatpush1.msra.mxu0 0.0
    %1134 = vmatprep.subr.mxu0 0.0
    %1135 = vmatpush1.msra.mxu0 0.0
    %1136 = vmatprep.subr.mxu0 0.0
    %1137 = vmatpush1.msra.mxu0 0.0
    %1138 = vmatprep.subr.mxu0 0.0
    %1139 = vmatpush1.msra.mxu0 0.0
    %1140 = vmatprep.subr.mxu0 0.0
    %1141 = vmatpush1.msra.mxu0 0.0
    %1142 = vmatprep.subr.mxu0 0.0
    %1143 = vmatpush1.msra.mxu0 0.0
    %1144 = vmatprep.subr.mxu0 0.0
    %1145 = vmatpush1.msra.mxu0 0.0
    %1146 = vmatprep.subr.mxu0 0.0
    %1147 = vmatpush1.msra.mxu0 0.0
    %1148 = vmatprep.subr.mxu0 0.0
    %1149 = vmatpush1.msra.mxu0 0.0
    %1150 = vmatprep.subr.mxu0 0.0
    %1151 = vmatpush1.msra.mxu0 0.0
    %1152 = vmatprep.subr.mxu0 0.0
    %1153 = vmatpush1.msra.mxu0 0.0
    %1154 = vmatprep.mubr.f32.mxu0 0.0
    %v1155 = vand.u32 %v709, 4294901760
    %1156 = vmatmul.mubr.f32.gmra.mrb[0].mxu0 %v1155
    %v1157 = vpop.f32.mrb[0].mxu0
    %v1158 = vadd.f32 %v1086, %v1157
    %v1159 = vpop.f32.mrb[0].mxu0
    %1160 = vdwg.mxu0
    %1161 = vst [vmem:[#allocation5] sm:$0xff] %v1158
    // Predicated region
    $region22: #{tpu_custom_call.1} parent=1 // pred_check
      _
    $region23: #{tpu_custom_call.1} parent=1 // pred_check_branch
      %1163 = sbr.rel (0) target = $region25
    $region24: #{tpu_custom_call.1} parent=1 // pred_region
      %s1165 = ssub.s32 128, 32
      %1166 = vsyncadd [#allocation3], %s1165
      %s1167 = sshll.u32 [#allocation5], 4
      %s1168 = int_to_ptr.vmem [resolvable:$true] %s1167
      %1173 = dma.vmem_to_hbm [thread:$0]  %s1168, 32, %s4, [#allocation3], 32, 32, 2
    $region25: #{tpu_custom_call.1} parent=1 // pred_fallthru
      _
    // Predicated region
    $region26: #{tpu_custom_call.1} parent=1 // pred_check
      _
    $region27: #{tpu_custom_call.1} parent=1 // pred_check_branch
      %1175 = sbr.rel (0) target = $region29
    $region28: #{tpu_custom_call.1} parent=1 // pred_region
      %s1177 = ssub.s32 128, 32
      %1178 = vsyncadd [#allocation7], %s1177
      %s1179 = sshll.u32 [#allocation6], 4
      %s1180 = int_to_ptr.vmem [resolvable:$true] %s1179
      %1185 = dma.vmem_to_hbm [thread:$0]  %s1180, 32, %s5, [#allocation7], 32, 32, 2
    $region29: #{tpu_custom_call.1} parent=1 // pred_fallthru
      _
    // Predicated region
    $region30: #{tpu_custom_call.1} parent=1 // pred_check
      _
    $region31: #{tpu_custom_call.1} parent=1 // pred_check_branch
      %1187 = sbr.rel (0) target = $region33
    $region32: #{tpu_custom_call.1} parent=1 // pred_region
      %1188 = dma.done [#allocation3], 128
    $region33: #{tpu_custom_call.1} parent=1 // pred_fallthru
      _
    // Predicated region
    $region34: #{tpu_custom_call.1} parent=1 // pred_check
      _
    $region35: #{tpu_custom_call.1} parent=1 // pred_check_branch
      %1190 = sbr.rel (0) target = $region37
    $region36: #{tpu_custom_call.1} parent=1 // pred_region
      %1191 = dma.done [#allocation7], 128
    $region37: #{tpu_custom_call.1} parent=1 // pred_fallthru
      _
    %1192 = vsyncpa [#allocation3], 1
    %1193 = vsyncpa [#allocation7], 1
    %1194 = vsyncpa [#allocation4], 1

</llo_original>
